<compile_context>
chip_gen: v7x
topology: tpu7x:2x2x1
jax: 0.10.0
libtpu: 0.0.40
codegen_flags: <defaults>
</compile_context>

<pallas_src>
import jax
import jax.numpy as jnp
import numpy as np
from jax.experimental import pallas as pl
from jax.experimental.pallas import tpu as pltpu


def _patch_merging_kernel(x_ref, we_ref, wo_ref, o_ref):
    # x_ref : (1, TH, 2, Wd, 2C)   natural row blocks, lane-dense on 2C
    # we_ref: (2C, CoutP)          weights applied to even input rows
    # wo_ref: (2C, CoutP)          weights applied to odd  input rows
    # o_ref : (1, TH*Wd, CoutP)
    th = x_ref.shape[1]
    wd = x_ref.shape[3]
    c2 = x_ref.shape[4]

    x = x_ref[0]                                     # (TH, 2, Wd, 2C)
    xe = x[:, 0].reshape(th * wd, c2)                # even input rows -> tokens
    xo = x[:, 1].reshape(th * wd, c2)                # odd  input rows -> tokens

    y = jnp.dot(xe, we_ref[...], preferred_element_type=jnp.float32)
    y = y + jnp.dot(xo, wo_ref[...], preferred_element_type=jnp.float32)
    o_ref[0] = y.astype(o_ref.dtype)


def _pick_row_tile(Hd, Wd, target_tokens=512):
    """Largest divisor TH of Hd with TH*Wd <= target and TH*Wd % 8 == 0."""
    if Hd * Wd <= target_tokens:
        return Hd
    best = Hd  # full-extent fallback (always layout-legal)
    for th in range(1, Hd):
        if Hd % th:
            continue
        tokens = th * Wd
        if tokens % 8:
            continue
        if tokens <= target_tokens:
            best = th
    return best


def patch_merging(x, x_size, weight):
    """x: (B, H*W, C); weight: (Cout, 4*C) (torch nn.Linear convention, no bias).

    Returns (B, (H//2)*(W//2), Cout), matching PatchMerging.forward.
    """
    B, L, C = x.shape
    H, W = x_size
    assert L == H * W, "input feature has wrong size"
    assert H % 2 == 0 and W % 2 == 0, f"x size ({H}*{W}) are not even."
    Hd, Wd = H // 2, W // 2
    Lp = Hd * Wd
    Cout = weight.shape[0]
    assert weight.shape[1] == 4 * C

    # Lane-dense output: pad Cout up to a multiple of 128 (sliced off at the end).
    CoutP = ((Cout + 127) // 128) * 128

    # Split the reduction weight into the four window quarters. PyTorch concat
    # order along the 4C axis is [even/even, odd/even, even/odd, odd/odd].
    w_ee = weight[:, 0 * C:1 * C]
    w_oe = weight[:, 1 * C:2 * C]
    w_eo = weight[:, 2 * C:3 * C]
    w_oo = weight[:, 3 * C:4 * C]
    # Even input rows carry [x_ee, x_eo] along the 2C lane dim; odd rows [x_oe, x_oo].
    we = jnp.concatenate([w_ee, w_eo], axis=1).T     # (2C, Cout)
    wo = jnp.concatenate([w_oe, w_oo], axis=1).T     # (2C, Cout)
    if CoutP != Cout:
        pad = ((0, 0), (0, CoutP - Cout))
        we = jnp.pad(we, pad)                        # zero pad -> exact result
        wo = jnp.pad(wo, pad)
    we = we.astype(x.dtype)
    wo = wo.astype(x.dtype)

    # FREE contiguous view (no transpose, no extra HBM pass):
    # (B, H*W, C) -> (B, Hd, 2, Wd, 2C). Last dim packs (even col, odd col) channels.
    xb = x.reshape(B, Hd, 2, Wd, 2 * C)

    TH = _pick_row_tile(Hd, Wd)
    grid = (B, Hd // TH)

    out = pl.pallas_call(
        _patch_merging_kernel,
        out_shape=jax.ShapeDtypeStruct((B, Lp, CoutP), x.dtype),
        grid=grid,
        in_specs=[
            pl.BlockSpec((1, TH, 2, Wd, 2 * C), lambda b, h: (b, h, 0, 0, 0)),
            pl.BlockSpec((2 * C, CoutP), lambda b, h: (0, 0)),
            pl.BlockSpec((2 * C, CoutP), lambda b, h: (0, 0)),
        ],
        out_specs=pl.BlockSpec((1, TH * Wd, CoutP), lambda b, h: (b, h, 0)),
        compiler_params=pltpu.CompilerParams(
            dimension_semantics=("parallel", "parallel"),
            vmem_limit_bytes=32 * 1024 * 1024,
        ),
    )(xb, we, wo)

    if CoutP != Cout:
        out = out[..., :Cout]
    return out


def _reference(x, x_size, weight):
    B, L, C = x.shape
    H, W = x_size
    xr = x.reshape(B, H, W, C)
    x0 = xr[:, 0::2, 0::2, :]
    x1 = xr[:, 1::2, 0::2, :]
    x2 = xr[:, 0::2, 1::2, :]
    x3 = xr[:, 1::2, 1::2, :]
    xc = jnp.concatenate([x0, x1, x2, x3], axis=-1).reshape(B, -1, 4 * C)
    return xc @ weight.T


if __name__ == "__main__":
    B, H, W = 2, 16, 16
    in_dim, out_dim = 32, 64   # typical PatchMerging: out_dim = 2 * in_dim

    key = jax.random.PRNGKey(0)
    k1, k2 = jax.random.split(key)
    x = jax.random.normal(k1, (B, H * W, in_dim), jnp.float32)
    weight = jax.random.normal(k2, (out_dim, 4 * in_dim), jnp.float32) * 0.05

    out = patch_merging(x, (H, W), weight)
    out = jax.block_until_ready(out)

    ref = _reference(x, (H, W), weight)
    assert out.shape == (B, (H // 2) * (W // 2), out_dim)
    np.testing.assert_allclose(np.asarray(out), np.asarray(ref),
                               rtol=5e-4, atol=5e-4)
    print("KERNEL_OK")
</pallas_src>

<mosaic_0001>
module attributes {stable_mosaic.version = 11 : i64} {
  func.func @_patch_merging_kernel(%arg0: i32, %arg1: i32, %arg2: memref<1x8x2x8x64xf32, #tpu.memory_space<vmem>>, %arg3: memref<64x128xf32, #tpu.memory_space<vmem>>, %arg4: memref<64x128xf32, #tpu.memory_space<vmem>>, %arg5: memref<1x64x128xf32, #tpu.memory_space<vmem>>) attributes {dimension_semantics = [#tpu.dimension_semantics<parallel>, #tpu.dimension_semantics<parallel>], iteration_bounds = array<i64: 2, 1>, scalar_prefetch = 0 : i64, scratch_operands = 0 : i64, tpu.core_type = #tpu.core_type<tc>, window_params = [{transform_indices = @transform_0, window_bounds = array<i64: 1, 8, 2, 8, 64>}, {pipeline_mode = #tpu.pipeline_mode<synchronous>, transform_indices = @transform_1, window_bounds = array<i64: 64, 128>}, {pipeline_mode = #tpu.pipeline_mode<synchronous>, transform_indices = @transform_2, window_bounds = array<i64: 64, 128>}, {transform_indices = @transform_3, window_bounds = array<i64: 1, 64, 128>}]} {
    %c0 = arith.constant 0 : index
    %c0_0 = arith.constant 0 : index
    %c0_1 = arith.constant 0 : index
    %c0_2 = arith.constant 0 : index
    %c0_3 = arith.constant 0 : index
    %0 = vector.load %arg2[%c0, %c0_0, %c0_1, %c0_2, %c0_3] : memref<1x8x2x8x64xf32, #tpu.memory_space<vmem>>, vector<1x8x2x8x64xf32>
    %1 = vector.shape_cast %0 : vector<1x8x2x8x64xf32> to vector<8x2x8x64xf32>
    %2 = vector.extract_strided_slice %1 {offsets = [0, 0, 0, 0], sizes = [8, 1, 8, 64], strides = [1, 1, 1, 1]} : vector<8x2x8x64xf32> to vector<8x1x8x64xf32>
    %3 = vector.shape_cast %2 : vector<8x1x8x64xf32> to vector<8x8x64xf32>
    %4 = vector.shape_cast %3 : vector<8x8x64xf32> to vector<64x64xf32>
    %5 = vector.extract_strided_slice %1 {offsets = [0, 1, 0, 0], sizes = [8, 1, 8, 64], strides = [1, 1, 1, 1]} : vector<8x2x8x64xf32> to vector<8x1x8x64xf32>
    %6 = vector.shape_cast %5 : vector<8x1x8x64xf32> to vector<8x8x64xf32>
    %7 = vector.shape_cast %6 : vector<8x8x64xf32> to vector<64x64xf32>
    %c0_4 = arith.constant 0 : index
    %c0_5 = arith.constant 0 : index
    %8 = vector.load %arg3[%c0_4, %c0_5] : memref<64x128xf32, #tpu.memory_space<vmem>>, vector<64x128xf32>
    %cst = arith.constant dense<0.000000e+00> : vector<64x128xf32>
    %9 = tpu.matmul %4, %8, %cst {dimension_numbers = #tpu.dot_dimension_numbers<[1], [0], [0], [1], [0, 0, 1, 1], [], []>} : vector<64x64xf32>, vector<64x128xf32>, vector<64x128xf32> -> vector<64x128xf32>
    %c0_6 = arith.constant 0 : index
    %c0_7 = arith.constant 0 : index
    %10 = vector.load %arg4[%c0_6, %c0_7] : memref<64x128xf32, #tpu.memory_space<vmem>>, vector<64x128xf32>
    %cst_8 = arith.constant dense<0.000000e+00> : vector<64x128xf32>
    %11 = tpu.matmul %7, %10, %cst_8 {dimension_numbers = #tpu.dot_dimension_numbers<[1], [0], [0], [1], [0, 0, 1, 1], [], []>} : vector<64x64xf32>, vector<64x128xf32>, vector<64x128xf32> -> vector<64x128xf32>
    %12 = arith.addf %9, %11 : vector<64x128xf32>
    %c0_9 = arith.constant 0 : index
    %c0_10 = arith.constant 0 : index
    %c0_11 = arith.constant 0 : index
    %13 = vector.load %arg5[%c0_9, %c0_10, %c0_11] : memref<1x64x128xf32, #tpu.memory_space<vmem>>, vector<1x64x128xf32>
    %14 = vector.shape_cast %13 : vector<1x64x128xf32> to vector<64x128xf32>
    %15 = vector.shape_cast %12 : vector<64x128xf32> to vector<1x64x128xf32>
    tpu.vector_store %arg5[%c0_9, %c0_10, %c0_11], %15 {strides = array<i32>} : memref<1x64x128xf32, #tpu.memory_space<vmem>>, vector<1x64x128xf32>,
    return
  }
  func.func @transform_0(%arg0: i32, %arg1: i32) -> (i32, i32, i32, i32, i32) {
    %c0_i32 = arith.constant 0 : i32
    %c0_i32_0 = arith.constant 0 : i32
    %c0_i32_1 = arith.constant 0 : i32
    %c0_i32_2 = arith.constant 0 : i32
    return %arg0, %arg1, %c0_i32, %c0_i32_0, %c0_i32_1 : i32, i32, i32, i32, i32
  }
  func.func @transform_1(%arg0: i32, %arg1: i32) -> (i32, i32) {
    %c0_i32 = arith.constant 0 : i32
    %c0_i32_0 = arith.constant 0 : i32
    %c0_i32_1 = arith.constant 0 : i32
    return %c0_i32, %c0_i32_0 : i32, i32
  }
  func.func @transform_2(%arg0: i32, %arg1: i32) -> (i32, i32) {
    %c0_i32 = arith.constant 0 : i32
    %c0_i32_0 = arith.constant 0 : i32
    %c0_i32_1 = arith.constant 0 : i32
    return %c0_i32, %c0_i32_0 : i32, i32
  }
  func.func @transform_3(%arg0: i32, %arg1: i32) -> (i32, i32, i32) {
    %c0_i32 = arith.constant 0 : i32
    %c0_i32_0 = arith.constant 0 : i32
    return %arg0, %arg1, %c0_i32 : i32, i32, i32
  }
}

</mosaic_0001>

<llo_original>
// kernel: tpu_custom_call.1
$region0: #{tpu_custom_call.1}
  #allocation0 [shape = 'u32[]', space=smem, size = 0x4, offset = 0x4, fixed_abs, tag = 'smem constant byte address 0x4 - core index']
  #allocation1 [shape = 'u32[144,128]{1,0:T(1,128)}', space=vmem, size = 0x12000, scoped, tag = 'internal scratch']
  %s0 = inlined_call_operand.hbm [shape: f32[2,8,2,8,64], index: 0, kind: input, shape index: {}]
  %s1 = inlined_call_operand.hbm [shape: f32[64,128], index: 1, kind: input, shape index: {}]
  %s2 = inlined_call_operand.hbm [shape: f32[64,128], index: 2, kind: input, shape index: {}]
  %s3 = inlined_call_operand.hbm [shape: f32[2,64,128], index: 3, kind: output, shape index: {}]
  %s4 = sld [smem:[#allocation0]]
  $region57: #{tpu_custom_call.1} parent=0
    _
  %s6 = ssub.s32 1, %s4
  %s7 = scalar_select 0, %s6, %s4
  $region1: #{tpu_custom_call.1} parent=0
    #allocation2 [shape = 'u8[131072]{0}', space=vmem, size = 0x20000, scoped, tag = 'input window, operand 0']
    #allocation3 [shape = 's32[2]{0}', space=sflag, size = 0x8, scoped, tag = 'scoped memory for tpu_custom_call.1']
    #allocation4 [shape = 's32[2]{0}', space=sflag, size = 0x8, scoped, tag = 'scoped memory for tpu_custom_call.1']
    #allocation5 [shape = 'u8[32768]{0}', space=vmem, size = 0x8000, scoped, tag = 'input window, operand 1, single buffered']
    #allocation6 [shape = 's32[1]{0}', space=sflag, size = 0x4, scoped, tag = 'scoped memory for tpu_custom_call.1']
    #allocation7 [shape = 'u8[32768]{0}', space=vmem, size = 0x8000, scoped, tag = 'input window, operand 2, single buffered']
    #allocation8 [shape = 'u8[65536]{0}', space=vmem, size = 0x10000, scoped, tag = 'output window, operand 0']
    %8 = vsyncpa [#allocation3], 0
    %s9 = scalar_lea.sflag [#allocation3], 1
    %10 = vsyncpa %s9, 0
    %11 = vsyncpa [#allocation6], 0
    %12 = vsyncpa [#allocation4], 0
    %s13 = scalar_lea.sflag [#allocation4], 1
    %14 = vsyncpa %s13, 0
    loop: start=0, step=1, limit=4
    $region2: #{tpu_custom_call.1} parent=1 // loop_pre_header
      _
    $region3: #{tpu_custom_call.1} parent=1 // loop_header
      %s16 = sphi 0, %s20
      %p17 = scmp.ge.s32.totalorder %s16, 4
      %s23 = sphi 0, %s35
      %s24 = sphi 0, %s31
      %s25 = sphi 0, %s23
      %s26 = sphi 0, %s24
      %s27 = sphi 0, %s25
      %s28 = sphi 0, %s26
      %s40 = sphi 0, %s42
      %s43 = sphi 0, %s40
      %s44 = sphi 0, %s43
      %s60 = sphi 0, %s44
      %s64 = sphi 0, %s64
      %s66 = sphi 0, %s64
      %s67 = sphi 0, %s66
      %s81 = sphi 0, %s67
      %s85 = sphi 0, %s85
      %s87 = sphi 0, %s85
      %s88 = sphi 0, %s87
      %s102 = sphi 0, %s88
      %s110 = sphi 0, %s112
      %s113 = sphi 0, %s110
      %s114 = sphi 0, %s113
      %s130 = sphi 0, %s114
    $region4: #{tpu_custom_call.1} parent=1 // loop_header_branch
      %19 = sbr.rel (%p17) target = $region8
    $region5: #{tpu_custom_call.1} parent=1 // loop_body
      %s21 = ssub.s32 %s16, 1
      %s22 = ssub.s32 %s16, 2
      %s29 = sadd.s32 1, %s24
      %p30 = scmp.ge.s32.totalorder %s29, 1
      %s31 = scalar_select %p30, 0, %s29
      %s32 = sadd.s32 1, %s23
      %s33 = scalar_select %p30, %s32, %s23
      %p34 = scmp.ge.s32.totalorder %s33, 2
      %s35 = scalar_select %p34, 0, %s33
      %s36 = ssub.s32 %s23, %s35
      %s37 = ssub.s32 %s24, %s31
      %s38 = sor.u32 %s36, %s37
      %p39 = scmp.eq.s32.totalorder %s38, 0
      %s41 = sadd.s32 %s40, 1
      %s42 = scalar_select %p39, %s40, %s41
      %p45 = pneg %p39
      %p46 = scmp.eq.s32.totalorder %s16, 1
      %p47 = por %p45, %p46
      %p48 = scmp.ne.s32.totalorder %s40, %s43
      %p49 = scmp.eq.s32.totalorder %s16, 0
      %p50 = por %p48, %p49
      %p51 = scmp.ne.s32.totalorder %s40, %s43
      %p52 = scmp.eq.s32.totalorder %s21, 1
      %p53 = por %p51, %p52
      %p54 = scmp.ne.s32.totalorder %s43, %s44
      %p55 = scmp.eq.s32.totalorder %s21, 0
      %p56 = por %p54, %p55
      %p57 = scmp.ne.s32.totalorder %s43, %s44
      %p58 = scmp.eq.s32.totalorder %s22, 1
      %p59 = por %p57, %p58
      %p61 = scmp.ne.s32.totalorder %s44, %s60
      %p62 = scmp.eq.s32.totalorder %s22, 0
      %p63 = por %p61, %p62
      %s65 = sadd.s32 %s64, 1
      %p68 = scmp.eq.s32.totalorder %s16, 1
      %p69 = scmp.ne.s32.totalorder %s64, %s66
      %p70 = scmp.eq.s32.totalorder %s16, 0
      %p71 = por %p69, %p70
      %p72 = scmp.ne.s32.totalorder %s64, %s66
      %p73 = scmp.eq.s32.totalorder %s21, 1
      %p74 = por %p72, %p73
      %p75 = scmp.ne.s32.totalorder %s66, %s67
      %p76 = scmp.eq.s32.totalorder %s21, 0
      %p77 = por %p75, %p76
      %p78 = scmp.ne.s32.totalorder %s66, %s67
      %p79 = scmp.eq.s32.totalorder %s22, 1
      %p80 = por %p78, %p79
      %p82 = scmp.ne.s32.totalorder %s67, %s81
      %p83 = scmp.eq.s32.totalorder %s22, 0
      %p84 = por %p82, %p83
      %s86 = sadd.s32 %s85, 1
      %p89 = scmp.eq.s32.totalorder %s16, 1
      %p90 = scmp.ne.s32.totalorder %s85, %s87
      %p91 = scmp.eq.s32.totalorder %s16, 0
      %p92 = por %p90, %p91
      %p93 = scmp.ne.s32.totalorder %s85, %s87
      %p94 = scmp.eq.s32.totalorder %s21, 1
      %p95 = por %p93, %p94
      %p96 = scmp.ne.s32.totalorder %s87, %s88
      %p97 = scmp.eq.s32.totalorder %s21, 0
      %p98 = por %p96, %p97
      %p99 = scmp.ne.s32.totalorder %s87, %s88
      %p100 = scmp.eq.s32.totalorder %s22, 1
      %p101 = por %p99, %p100
      %p103 = scmp.ne.s32.totalorder %s88, %s102
      %p104 = scmp.eq.s32.totalorder %s22, 0
      %p105 = por %p103, %p104
      %s106 = ssub.s32 %s23, %s35
      %s107 = ssub.s32 %s24, %s31
      %s108 = sor.u32 %s106, %s107
      %p109 = scmp.eq.s32.totalorder %s108, 0
      %s111 = sadd.s32 %s110, 1
      %s112 = scalar_select %p109, %s110, %s111
      %p115 = pneg %p109
      %p116 = scmp.eq.s32.totalorder %s16, 1
      %p117 = por %p115, %p116
      %p118 = scmp.ne.s32.totalorder %s110, %s113
      %p119 = scmp.eq.s32.totalorder %s16, 0
      %p120 = por %p118, %p119
      %p121 = scmp.ne.s32.totalorder %s110, %s113
      %p122 = scmp.eq.s32.totalorder %s21, 1
      %p123 = por %p121, %p122
      %p124 = scmp.ne.s32.totalorder %s113, %s114
      %p125 = scmp.eq.s32.totalorder %s21, 0
      %p126 = por %p124, %p125
      %p127 = scmp.ne.s32.totalorder %s113, %s114
      %p128 = scmp.eq.s32.totalorder %s22, 1
      %p129 = por %p127, %p128
      %p131 = scmp.ne.s32.totalorder %s114, %s130
      %p132 = scmp.eq.s32.totalorder %s22, 0
      %p133 = por %p131, %p132
      %p134 = scmp.le.s32.totalorder 1, %s16
      %p135 = scmp.lt.s32.totalorder %s16, 3
      %p136 = pnand %p134, %p135
      %p137 = pneg %p136
      // Predicated region
      $region9: #{tpu_custom_call.1} parent=5 // pred_check
        _
      $region10: #{tpu_custom_call.1} parent=5 // pred_check_branch
        %139 = sbr.rel (%p136) target = $region12
      $region11: #{tpu_custom_call.1} parent=5 // pred_region
        %s140 = ssub.s32 %s16, 1
        // Predicated region
        $region13: #{tpu_custom_call.1} parent=11 // pred_check
          %p141 = pneg %p77
        $region14: #{tpu_custom_call.1} parent=11 // pred_check_branch
          %143 = sbr.rel (%p141) target = $region16
        $region15: #{tpu_custom_call.1} parent=11 // pred_region
          %s145 = ssub.s32 1024, 1024
          %146 = vsyncadd [#allocation6], %s145
          %s147 = sshll.u32 [#allocation5], 4
          %s148 = int_to_ptr.vmem [resolvable:$true] %s147
          %153 = dma.hbm_to_vmem [thread:$0]  %s1, 1024, %s148, [#allocation6], 128, 128, 8
        $region16: #{tpu_custom_call.1} parent=11 // pred_fallthru
          _
        // Predicated region
        $region17: #{tpu_custom_call.1} parent=11 // pred_check
          %p154 = pneg %p98
        $region18: #{tpu_custom_call.1} parent=11 // pred_check_branch
          %156 = sbr.rel (%p154) target = $region20
        $region19: #{tpu_custom_call.1} parent=11 // pred_region
          %s158 = ssub.s32 1024, 1024
          %159 = vsyncadd [#allocation6], %s158
          %s160 = sshll.u32 [#allocation7], 4
          %s161 = int_to_ptr.vmem [resolvable:$true] %s160
          %166 = dma.hbm_to_vmem [thread:$0]  %s2, 1024, %s161, [#allocation6], 128, 128, 8
        $region20: #{tpu_custom_call.1} parent=11 // pred_fallthru
          _
      $region12: #{tpu_custom_call.1} parent=5 // pred_fallthru
        _
      %p167 = scmp.lt.s32.totalorder %s16, 2
      // Predicated region
      $region21: #{tpu_custom_call.1} parent=5 // pred_check
        %p168 = pneg %p167
      $region22: #{tpu_custom_call.1} parent=5 // pred_check_branch
        %170 = sbr.rel (%p168) target = $region24
      $region23: #{tpu_custom_call.1} parent=5 // pred_region
        // Predicated region
        $region25: #{tpu_custom_call.1} parent=23 // pred_check
          %p171 = pneg %p50
        $region26: #{tpu_custom_call.1} parent=23 // pred_check_branch
          %173 = sbr.rel (%p171) target = $region28
        $region27: #{tpu_custom_call.1} parent=23 // pred_region
          %s174 = sand.u32 %s40, 1
          %s175 = scalar_lea.sflag [#allocation3], %s174
          %s176 = sand.u32 %s40, 1
          %s177 = smul.addr %s176, 128
          %s178 = scalar_lea.vmem [#allocation2], %s177
          %s179 = smul.u32 8, %s24
          %s181 = ssub.s32 2048, 2048
          %182 = vsyncadd %s175, %s181
          %s183 = smul.addr %s179, 2
          %s184 = smul.addr %s23, 16
          %s185 = sadd.s32 %s183, %s184
          %s186 = smul.addr %s185, 128
          %s187 = scalar_lea.hbm %s0, %s186
          %s188 = sshll.u32 %s178, 4
          %s189 = int_to_ptr.vmem [resolvable:$true] %s188
          %194 = dma.hbm_to_vmem [thread:$0]  %s187, 2048, %s189, %s175, 128, 128, 8
        $region28: #{tpu_custom_call.1} parent=23 // pred_fallthru
          _
      $region24: #{tpu_custom_call.1} parent=5 // pred_fallthru
        _
      %p195 = scmp.le.s32.totalorder 1, %s16
      %p196 = scmp.lt.s32.totalorder %s16, 3
      %p197 = pnand %p195, %p196
      %p198 = pneg %p197
      // Predicated region
      $region29: #{tpu_custom_call.1} parent=5 // pred_check
        _
      $region30: #{tpu_custom_call.1} parent=5 // pred_check_branch
        %200 = sbr.rel (%p197) target = $region32
      $region31: #{tpu_custom_call.1} parent=5 // pred_region
        %s201 = ssub.s32 %s16, 1
        %s202 = sand.u32 %s43, 1
        %s203 = scalar_lea.sflag [#allocation3], %s202
        %s204 = sand.u32 %s43, 1
        %s205 = smul.addr %s204, 128
        %s206 = scalar_lea.vmem [#allocation2], %s205
        // Predicated region
        $region33: #{tpu_custom_call.1} parent=31 // pred_check
          %p207 = pneg %p56
        $region34: #{tpu_custom_call.1} parent=31 // pred_check_branch
          %209 = sbr.rel (%p207) target = $region36
        $region35: #{tpu_custom_call.1} parent=31 // pred_region
          %210 = dma.done %s203, 2048
        $region36: #{tpu_custom_call.1} parent=31 // pred_fallthru
          _
        // Predicated region
        $region37: #{tpu_custom_call.1} parent=31 // pred_check
          %p211 = pneg %p77
        $region38: #{tpu_custom_call.1} parent=31 // pred_check_branch
          %213 = sbr.rel (%p211) target = $region40
        $region39: #{tpu_custom_call.1} parent=31 // pred_region
          %214 = dma.done [#allocation6], 1024
        $region40: #{tpu_custom_call.1} parent=31 // pred_fallthru
          _
        // Predicated region
        $region41: #{tpu_custom_call.1} parent=31 // pred_check
          %p215 = pneg %p98
        $region42: #{tpu_custom_call.1} parent=31 // pred_check_branch
          %217 = sbr.rel (%p215) target = $region44
        $region43: #{tpu_custom_call.1} parent=31 // pred_region
          %218 = dma.done [#allocation6], 1024
        $region44: #{tpu_custom_call.1} parent=31 // pred_fallthru
          _
        %s219 = sand.u32 %s43, 1
        %s220 = scalar_lea.sflag [#allocation3], %s219
        %s221 = sand.u32 %s43, 1
        %s222 = smul.addr %s221, 128
        %s223 = scalar_lea.vmem [#allocation2], %s222
        %p224 = pneg %p56
        %p225 = pneg %p53
        %p226 = pneg %p77
        %p227 = pneg %p74
        %p228 = pneg %p98
        %p229 = pneg %p95
        %p230 = pneg %p126
        %p231 = pneg %p123
        %s232 = sand.u32 %s113, 1
        %s233 = scalar_lea.sflag [#allocation4], %s232
        %s234 = sand.u32 %s113, 1
        %s235 = smul.addr %s234, 64
        %s236 = scalar_lea.vmem [#allocation8], %s235
        %s237 = smul.u32 8, %s26
        %s238 = smul.u32 8, %s26
        %v239 = vld [vmem:[%s206] sm:$0xff]
        %v240 = vld [vmem:[%s206 + $0x8] sm:$0xff]
        %v241 = vld [vmem:[%s206 + $0x10] sm:$0xff]
        %v242 = vld [vmem:[%s206 + $0x18] sm:$0xff]
        %v243 = vld [vmem:[%s206 + $0x20] sm:$0xff]
        %v244 = vld [vmem:[%s206 + $0x28] sm:$0xff]
        %v245 = vld [vmem:[%s206 + $0x30] sm:$0xff]
        %v246 = vld [vmem:[%s206 + $0x38] sm:$0xff]
        %v247 = vld [vmem:[%s206 + $0x40] sm:$0xff]
        %v248 = vld [vmem:[%s206 + $0x48] sm:$0xff]
        %v249 = vld [vmem:[%s206 + $0x50] sm:$0xff]
        %v250 = vld [vmem:[%s206 + $0x58] sm:$0xff]
        %v251 = vld [vmem:[%s206 + $0x60] sm:$0xff]
        %v252 = vld [vmem:[%s206 + $0x68] sm:$0xff]
        %v253 = vld [vmem:[%s206 + $0x70] sm:$0xff]
        %v254 = vld [vmem:[%s206 + $0x78] sm:$0xff]
        %v255 = vld [vmem:[#allocation5] sm:$0xff]
        %v256 = vld [vmem:[#allocation5 + $0x8] sm:$0xff]
        %v257 = vld [vmem:[#allocation5 + $0x10] sm:$0xff]
        %v258 = vld [vmem:[#allocation5 + $0x18] sm:$0xff]
        %v259 = vld [vmem:[#allocation5 + $0x20] sm:$0xff]
        %v260 = vld [vmem:[#allocation5 + $0x28] sm:$0xff]
        %v261 = vld [vmem:[#allocation5 + $0x30] sm:$0xff]
        %v262 = vld [vmem:[#allocation5 + $0x38] sm:$0xff]
        %v263 = vld [vmem:[#allocation7] sm:$0xff]
        %v264 = vld [vmem:[#allocation7 + $0x8] sm:$0xff]
        %v265 = vld [vmem:[#allocation7 + $0x10] sm:$0xff]
        %v266 = vld [vmem:[#allocation7 + $0x18] sm:$0xff]
        %v267 = vld [vmem:[#allocation7 + $0x20] sm:$0xff]
        %v268 = vld [vmem:[#allocation7 + $0x28] sm:$0xff]
        %v269 = vld [vmem:[#allocation7 + $0x30] sm:$0xff]
        %v270 = vld [vmem:[#allocation7 + $0x38] sm:$0xff]
        %vm271 = vcmask 523264
        %v273 = vsel %vm271, %v240, 0
        %v276 = vsel %vm271, %v242, 0
        %v279 = vsel %vm271, %v244, 0
        %v282 = vsel %vm271, %v246, 0
        %v285 = vsel %vm271, %v248, 0
        %v288 = vsel %vm271, %v250, 0
        %v291 = vsel %vm271, %v252, 0
        %v294 = vsel %vm271, %v254, 0
        %296 = vmatprep.subr.mxu0 0.0
        %297 = vmatpush1.msra.mxu0 %v263
        %298 = vmatprep.subr.mxu0 0.0
        %299 = vmatpush1.msra.mxu0 %v264
        %300 = vmatprep.subr.mxu0 0.0
        %301 = vmatpush1.msra.mxu0 %v265
        %302 = vmatprep.subr.mxu0 0.0
        %303 = vmatpush1.msra.mxu0 %v266
        %304 = vmatprep.subr.mxu0 0.0
        %305 = vmatpush1.msra.mxu0 %v267
        %306 = vmatprep.subr.mxu0 0.0
        %307 = vmatpush1.msra.mxu0 %v268
        %308 = vmatprep.subr.mxu0 0.0
        %309 = vmatpush1.msra.mxu0 %v269
        %310 = vmatprep.subr.mxu0 0.0
        %311 = vmatpush1.msra.mxu0 %v270
        %312 = vmatprep.subr.mxu0 0.0
        %313 = vmatpush1.msra.mxu0 0.0
        %314 = vmatprep.subr.mxu0 0.0
        %315 = vmatpush1.msra.mxu0 0.0
        %316 = vmatprep.subr.mxu0 0.0
        %317 = vmatpush1.msra.mxu0 0.0
        %318 = vmatprep.subr.mxu0 0.0
        %319 = vmatpush1.msra.mxu0 0.0
        %320 = vmatprep.subr.mxu0 0.0
        %321 = vmatpush1.msra.mxu0 0.0
        %322 = vmatprep.subr.mxu0 0.0
        %323 = vmatpush1.msra.mxu0 0.0
        %324 = vmatprep.subr.mxu0 0.0
        %325 = vmatpush1.msra.mxu0 0.0
        %326 = vmatprep.subr.mxu0 0.0
        %327 = vmatpush1.msra.mxu0 0.0
        %328 = vmatprep.subr.mxu0 0.0
        %329 = vmatpush1.msra.mxu0 0.0
        %330 = vmatprep.subr.mxu0 0.0
        %331 = vmatpush1.msra.mxu0 0.0
        %332 = vmatprep.subr.mxu0 0.0
        %333 = vmatpush1.msra.mxu0 0.0
        %334 = vmatprep.subr.mxu0 0.0
        %335 = vmatpush1.msra.mxu0 0.0
        %336 = vmatprep.subr.mxu0 0.0
        %337 = vmatpush1.msra.mxu0 0.0
        %338 = vmatprep.subr.mxu0 0.0
        %339 = vmatpush1.msra.mxu0 0.0
        %340 = vmatprep.subr.mxu0 0.0
        %341 = vmatpush1.msra.mxu0 0.0
        %342 = vmatprep.subr.mxu0 0.0
        %343 = vmatpush1.msra.mxu0 0.0
        %344 = vmatprep.subr.mxu0 0.0
        %345 = vmatpush1.msra.mxu0 0.0
        %346 = vmatprep.subr.mxu0 0.0
        %347 = vmatpush1.msra.mxu0 0.0
        %348 = vmatprep.subr.mxu0 0.0
        %349 = vmatpush1.msra.mxu0 0.0
        %350 = vmatprep.subr.mxu0 0.0
        %351 = vmatpush1.msra.mxu0 0.0
        %352 = vmatprep.subr.mxu0 0.0
        %353 = vmatpush1.msra.mxu0 0.0
        %354 = vmatprep.subr.mxu0 0.0
        %355 = vmatpush1.msra.mxu0 0.0
        %356 = vmatprep.subr.mxu0 0.0
        %357 = vmatpush1.msra.mxu0 0.0
        %358 = vmatprep.subr.mxu0 0.0
        %359 = vmatpush1.msra.mxu0 0.0
        %360 = vmatprep.mubr.f32.mxu0 0.0
        %361 = vmatmul.mubr.f32.gmra.mrb[0].mxu0 %v273
        %v362 = vpop.f32.mrb[0].mxu0
        %v363 = vadd.f32 0.0, %v362
        %v364 = vpop.f32.mrb[0].mxu0
        %365 = vmatprep.mubr.f32.mxu0 0.0
        %366 = vmatmul.mubr.f32.gmra.mrb[0].mxu0 %v276
        %v367 = vpop.f32.mrb[0].mxu0
        %v368 = vadd.f32 0.0, %v367
        %v369 = vpop.f32.mrb[0].mxu0
        %370 = vmatprep.mubr.f32.mxu0 0.0
        %371 = vmatmul.mubr.f32.gmra.mrb[0].mxu0 %v279
        %v372 = vpop.f32.mrb[0].mxu0
        %v373 = vadd.f32 0.0, %v372
        %v374 = vpop.f32.mrb[0].mxu0
        %375 = vmatprep.mubr.f32.mxu0 0.0
        %376 = vmatmul.mubr.f32.gmra.mrb[0].mxu0 %v282
        %v377 = vpop.f32.mrb[0].mxu0
        %v378 = vadd.f32 0.0, %v377
        %v379 = vpop.f32.mrb[0].mxu0
        %380 = vmatprep.mubr.f32.mxu0 0.0
        %381 = vmatmul.mubr.f32.gmra.mrb[0].mxu0 %v285
        %v382 = vpop.f32.mrb[0].mxu0
        %v383 = vadd.f32 0.0, %v382
        %v384 = vpop.f32.mrb[0].mxu0
        %385 = vmatprep.mubr.f32.mxu0 0.0
        %386 = vmatmul.mubr.f32.gmra.mrb[0].mxu0 %v288
        %v387 = vpop.f32.mrb[0].mxu0
        %v388 = vadd.f32 0.0, %v387
        %v389 = vpop.f32.mrb[0].mxu0
        %390 = vmatprep.mubr.f32.mxu0 0.0
        %391 = vmatmul.mubr.f32.gmra.mrb[0].mxu0 %v291
        %v392 = vpop.f32.mrb[0].mxu0
        %v393 = vadd.f32 0.0, %v392
        %v394 = vpop.f32.mrb[0].mxu0
        %395 = vmatprep.mubr.f32.mxu0 0.0
        %396 = vmatmul.mubr.f32.gmra.mrb[0].mxu0 %v294
        %v397 = vpop.f32.mrb[0].mxu0
        %v398 = vadd.f32 0.0, %v397
        %v399 = vpop.f32.mrb[0].mxu0
        %400 = vdwg.mxu0
        %v402 = vsel %vm271, %v239, 0
        %v405 = vsel %vm271, %v241, 0
        %v408 = vsel %vm271, %v243, 0
        %v411 = vsel %vm271, %v245, 0
        %v414 = vsel %vm271, %v247, 0
        %v417 = vsel %vm271, %v249, 0
        %v420 = vsel %vm271, %v251, 0
        %v423 = vsel %vm271, %v253, 0
        %425 = vmatprep.subr.mxu0 0.0
        %426 = vmatpush1.msra.mxu0 %v255
        %427 = vmatprep.subr.mxu0 0.0
        %428 = vmatpush1.msra.mxu0 %v256
        %429 = vmatprep.subr.mxu0 0.0
        %430 = vmatpush1.msra.mxu0 %v257
        %431 = vmatprep.subr.mxu0 0.0
        %432 = vmatpush1.msra.mxu0 %v258
        %433 = vmatprep.subr.mxu0 0.0
        %434 = vmatpush1.msra.mxu0 %v259
        %435 = vmatprep.subr.mxu0 0.0
        %436 = vmatpush1.msra.mxu0 %v260
        %437 = vmatprep.subr.mxu0 0.0
        %438 = vmatpush1.msra.mxu0 %v261
        %439 = vmatprep.subr.mxu0 0.0
        %440 = vmatpush1.msra.mxu0 %v262
        %441 = vmatprep.subr.mxu0 0.0
        %442 = vmatpush1.msra.mxu0 0.0
        %443 = vmatprep.subr.mxu0 0.0
        %444 = vmatpush1.msra.mxu0 0.0
        %445 = vmatprep.subr.mxu0 0.0
        %446 = vmatpush1.msra.mxu0 0.0
        %447 = vmatprep.subr.mxu0 0.0
        %448 = vmatpush1.msra.mxu0 0.0
        %449 = vmatprep.subr.mxu0 0.0
        %450 = vmatpush1.msra.mxu0 0.0
        %451 = vmatprep.subr.mxu0 0.0
        %452 = vmatpush1.msra.mxu0 0.0
        %453 = vmatprep.subr.mxu0 0.0
        %454 = vmatpush1.msra.mxu0 0.0
        %455 = vmatprep.subr.mxu0 0.0
        %456 = vmatpush1.msra.mxu0 0.0
        %457 = vmatprep.subr.mxu0 0.0
        %458 = vmatpush1.msra.mxu0 0.0
        %459 = vmatprep.subr.mxu0 0.0
        %460 = vmatpush1.msra.mxu0 0.0
        %461 = vmatprep.subr.mxu0 0.0
        %462 = vmatpush1.msra.mxu0 0.0
        %463 = vmatprep.subr.mxu0 0.0
        %464 = vmatpush1.msra.mxu0 0.0
        %465 = vmatprep.subr.mxu0 0.0
        %466 = vmatpush1.msra.mxu0 0.0
        %467 = vmatprep.subr.mxu0 0.0
        %468 = vmatpush1.msra.mxu0 0.0
        %469 = vmatprep.subr.mxu0 0.0
        %470 = vmatpush1.msra.mxu0 0.0
        %471 = vmatprep.subr.mxu0 0.0
        %472 = vmatpush1.msra.mxu0 0.0
        %473 = vmatprep.subr.mxu0 0.0
        %474 = vmatpush1.msra.mxu0 0.0
        %475 = vmatprep.subr.mxu0 0.0
        %476 = vmatpush1.msra.mxu0 0.0
        %477 = vmatprep.subr.mxu0 0.0
        %478 = vmatpush1.msra.mxu0 0.0
        %479 = vmatprep.subr.mxu0 0.0
        %480 = vmatpush1.msra.mxu0 0.0
        %481 = vmatprep.subr.mxu0 0.0
        %482 = vmatpush1.msra.mxu0 0.0
        %483 = vmatprep.subr.mxu0 0.0
        %484 = vmatpush1.msra.mxu0 0.0
        %485 = vmatprep.subr.mxu0 0.0
        %486 = vmatpush1.msra.mxu0 0.0
        %487 = vmatprep.subr.mxu0 0.0
        %488 = vmatpush1.msra.mxu0 0.0
        %489 = vmatprep.mubr.f32.mxu0 0.0
        %490 = vmatmul.mubr.f32.gmra.mrb[0].mxu0 %v402
        %v491 = vpop.f32.mrb[0].mxu0
        %v492 = vadd.f32 %v363, %v491
        %v493 = vpop.f32.mrb[0].mxu0
        %494 = vmatprep.mubr.f32.mxu0 0.0
        %495 = vmatmul.mubr.f32.gmra.mrb[0].mxu0 %v405
        %v496 = vpop.f32.mrb[0].mxu0
        %v497 = vadd.f32 %v368, %v496
        %v498 = vpop.f32.mrb[0].mxu0
        %499 = vmatprep.mubr.f32.mxu0 0.0
        %500 = vmatmul.mubr.f32.gmra.mrb[0].mxu0 %v408
        %v501 = vpop.f32.mrb[0].mxu0
        %v502 = vadd.f32 %v373, %v501
        %v503 = vpop.f32.mrb[0].mxu0
        %504 = vmatprep.mubr.f32.mxu0 0.0
        %505 = vmatmul.mubr.f32.gmra.mrb[0].mxu0 %v411
        %v506 = vpop.f32.mrb[0].mxu0
        %v507 = vadd.f32 %v378, %v506
        %v508 = vpop.f32.mrb[0].mxu0
        %509 = vmatprep.mubr.f32.mxu0 0.0
        %510 = vmatmul.mubr.f32.gmra.mrb[0].mxu0 %v414
        %v511 = vpop.f32.mrb[0].mxu0
        %v512 = vadd.f32 %v383, %v511
        %v513 = vpop.f32.mrb[0].mxu0
        %514 = vmatprep.mubr.f32.mxu0 0.0
        %515 = vmatmul.mubr.f32.gmra.mrb[0].mxu0 %v417
        %v516 = vpop.f32.mrb[0].mxu0
        %v517 = vadd.f32 %v388, %v516
        %v518 = vpop.f32.mrb[0].mxu0
        %519 = vmatprep.mubr.f32.mxu0 0.0
        %520 = vmatmul.mubr.f32.gmra.mrb[0].mxu0 %v420
        %v521 = vpop.f32.mrb[0].mxu0
        %v522 = vadd.f32 %v393, %v521
        %v523 = vpop.f32.mrb[0].mxu0
        %524 = vmatprep.mubr.f32.mxu0 0.0
        %525 = vmatmul.mubr.f32.gmra.mrb[0].mxu0 %v423
        %v526 = vpop.f32.mrb[0].mxu0
        %v527 = vadd.f32 %v398, %v526
        %v528 = vpop.f32.mrb[0].mxu0
        %529 = vdwg.mxu0
        %530 = vst [vmem:[%s236] sm:$0xff] %v492
        %531 = vst [vmem:[%s236 + $0x8] sm:$0xff] %v497
        %532 = vst [vmem:[%s236 + $0x10] sm:$0xff] %v502
        %533 = vst [vmem:[%s236 + $0x18] sm:$0xff] %v507
        %534 = vst [vmem:[%s236 + $0x20] sm:$0xff] %v512
        %535 = vst [vmem:[%s236 + $0x28] sm:$0xff] %v517
        %536 = vst [vmem:[%s236 + $0x30] sm:$0xff] %v522
        %537 = vst [vmem:[%s236 + $0x38] sm:$0xff] %v527
        %s538 = sand.u32 %s113, 1
        %s539 = scalar_lea.sflag [#allocation4], %s538
        %s540 = sand.u32 %s113, 1
        %s541 = smul.addr %s540, 64
        %s542 = scalar_lea.vmem [#allocation8], %s541
        // Predicated region
        $region45: #{tpu_custom_call.1} parent=31 // pred_check
          %p543 = pneg %p123
        $region46: #{tpu_custom_call.1} parent=31 // pred_check_branch
          %545 = sbr.rel (%p543) target = $region48
        $region47: #{tpu_custom_call.1} parent=31 // pred_region
          %s546 = smul.u32 8, %s26
          %s548 = ssub.s32 1024, 1024
          %549 = vsyncadd %s539, %s548
          %s550 = smul.addr %s25, 8
          %s551 = sadd.s32 %s546, %s550
          %s552 = smul.addr %s551, 128
          %s553 = scalar_lea.hbm %s3, %s552
          %s554 = sshll.u32 %s542, 4
          %s555 = int_to_ptr.vmem [resolvable:$true] %s554
          %560 = dma.vmem_to_hbm [thread:$0]  %s555, 1024, %s553, %s539, 128, 128, 8
        $region48: #{tpu_custom_call.1} parent=31 // pred_fallthru
          _
      $region32: #{tpu_custom_call.1} parent=5 // pred_fallthru
        _
      %p561 = scmp.le.s32.totalorder 2, %s16
      // Predicated region
      $region49: #{tpu_custom_call.1} parent=5 // pred_check
        %p562 = pneg %p561
      $region50: #{tpu_custom_call.1} parent=5 // pred_check_branch
        %564 = sbr.rel (%p562) target = $region52
      $region51: #{tpu_custom_call.1} parent=5 // pred_region
        %s565 = ssub.s32 %s16, 2
        // Predicated region
        $region53: #{tpu_custom_call.1} parent=51 // pred_check
          %p566 = pneg %p129
        $region54: #{tpu_custom_call.1} parent=51 // pred_check_branch
          %568 = sbr.rel (%p566) target = $region56
        $region55: #{tpu_custom_call.1} parent=51 // pred_region
          %s569 = sand.u32 %s114, 1
          %s570 = scalar_lea.sflag [#allocation4], %s569
          %s571 = sand.u32 %s114, 1
          %s572 = smul.addr %s571, 64
          %s573 = scalar_lea.vmem [#allocation8], %s572
          %574 = dma.done %s570, 1024
        $region56: #{tpu_custom_call.1} parent=51 // pred_fallthru
          _
      $region52: #{tpu_custom_call.1} parent=5 // pred_fallthru
        _
    $region6: #{tpu_custom_call.1} parent=1 // loop_footer
      %s20 = sadd.s32 1, %s16
    $region7: #{tpu_custom_call.1} parent=1 // loop_footer_branch
      %15 = sbr.rel target = $region3
    $region8: #{tpu_custom_call.1} parent=1 // loop_exit
      _
    %575 = vsyncpa [#allocation3], 1
    %s576 = scalar_lea.sflag [#allocation3], 1
    %577 = vsyncpa %s576, 1
    %578 = vsyncpa [#allocation6], 1
    %579 = vsyncpa [#allocation4], 1
    %s580 = scalar_lea.sflag [#allocation4], 1
    %581 = vsyncpa %s580, 1

</llo_original>
